<compile_context>
chip_gen: v7x
topology: tpu7x:2x2x1
jax: 0.10.0
libtpu: 0.0.40
codegen_flags: <defaults>
</compile_context>

<pallas_src>
import jax
import jax.numpy as jnp
from jax.experimental import pallas as pl
from jax.experimental.pallas import tpu as pltpu

INPUT_LENGTH = 64
NUM_BRANCH = 12

# ---- branch table (pre, post) in weight-stacking order: lin_p1..p6, lin_n1..n6
BRANCH_DEFS = (
    ("LUUL", "LURe"),   # p1
    ("LUUL", "ULeR"),   # p2
    ("ULLU", "ReLU"),   # p3
    ("LURe", "ReLU"),   # p4
    ("ULLU", "eRUL"),   # p5
    ("ULLU", "ULeR"),   # p6
    ("LUUL", "ReLU"),   # n1
    ("eRUL", "ULeR"),   # n2
    ("ULeR", "eRUL"),   # n3
    ("LUUL", "LURe"),   # n4
    ("eRUL", "eRUL"),   # n5
    ("ULeR", "ReLU"),   # n6
)

# pre(x) = alpha * relu(x) + beta * relu(-x)
PRE_COEF = {
    "LUUL": (-1.0, -1.0),   # -abs(x)
    "ULLU": (1.0, 1.0),     #  abs(x)
    "LURe": (-1.0, 0.0),    # -relu(x)
    "eRUL": (0.0, -1.0),    # -relu(-x)
    "ULeR": (0.0, 1.0),     #  relu(-x)
}

# Negating a branch's packed weights flips the sign of its matmul result h,
# turning post f(z) into f(-h):  ULeR -> ReLU  and  LURe -> eRUL.  After this
# fold, every branch's post is either max(h,0) ("max" group) or min(h,0)
# ("min" group == eRUL).
POST_NEGATE = {"ReLU": False, "ULeR": True, "LURe": True, "eRUL": False}
POST_GROUP = {"ReLU": "max", "ULeR": "max", "LURe": "min", "eRUL": "min"}


def _round_up(n, m):
    return ((n + m - 1) // m) * m


_N_MAX = sum(1 for _, post in BRANCH_DEFS if POST_GROUP[post] == "max")   # 7
_N_MIN = NUM_BRANCH - _N_MAX                                              # 5
MAX_COLS = _round_up(_N_MAX * INPUT_LENGTH, 128)                          # 512
MIN_COLS = _round_up(_N_MIN * INPUT_LENGTH, 128)                          # 384
PACK_COLS = MAX_COLS + MIN_COLS                                           # 896


def pack_weights(weights):
    """weights: (12, 64, 64) f32, weights[b] = W_b in (in, out) layout (i.e.
    the PyTorch Linear weight already transposed).  Returns the fused bf16
    weight of shape (128, 896):
      rows 0:64   -> coefficient on relu(x)
      rows 64:128 -> coefficient on relu(-x)
      columns     -> branches grouped by post ("max" slab then "min" slab),
                     each slab zero-padded to a multiple of 128 lanes.
    """
    D = INPUT_LENGTH
    max_blocks, min_blocks = [], []
    for b, (pre, post) in enumerate(BRANCH_DEFS):
        alpha, beta = PRE_COEF[pre]
        sgn = -1.0 if POST_NEGATE[post] else 1.0
        blk = jnp.concatenate(
            [sgn * alpha * weights[b], sgn * beta * weights[b]], axis=0)  # (128, 64)
        (max_blocks if POST_GROUP[post] == "max" else min_blocks).append(blk)
    zero = jnp.zeros((2 * D, D), weights.dtype)
    while len(max_blocks) * D < MAX_COLS:
        max_blocks.append(zero)
    while len(min_blocks) * D < MIN_COLS:
        min_blocks.append(zero)
    packed = jnp.concatenate(max_blocks + min_blocks, axis=1)  # (128, 896)
    return packed.astype(jnp.bfloat16)


def _tree_sum_128(m):
    """(TB, k*128) -> (TB, 128): pairwise tree sum of 128-lane-aligned chunks."""
    n_chunks = m.shape[1] // 128
    chunks = [m[:, i * 128:(i + 1) * 128] for i in range(n_chunks)]
    while len(chunks) > 1:
        nxt = [chunks[i] + chunks[i + 1] for i in range(0, len(chunks) - 1, 2)]
        if len(chunks) % 2:
            nxt.append(chunks[-1])
        chunks = nxt
    return chunks[0]


def _network_kernel(x_ref, w_ref, o_ref):
    """x_ref: (TB, 64) f32 VMEM.  w_ref: (128, 896) bf16 VMEM (fused weights).
    o_ref: (TB, 64) f32 VMEM."""
    D = INPUT_LENGTH
    # Pre-activations: only relu(x) and relu(-x), computed once, in bf16
    # (exact for relu; operands go to the MXU in bf16 anyway).
    xb = x_ref[...].astype(jnp.bfloat16)
    xr = jnp.concatenate(
        [jnp.maximum(xb, 0), jnp.maximum(-xb, 0)], axis=-1)          # (TB, 128)

    # Single fused matmul: K=128, N=896, f32 accumulation.
    h = jnp.dot(xr, w_ref[...], preferred_element_type=jnp.float32)  # (TB, 896)

    # Post activations: one max over the first slab, one min over the second
    # (sign of LURe/ULeR branches already folded into the packed weights).
    hmax = jnp.maximum(h[:, :MAX_COLS], 0.0)     # ReLU / ULeR branches (+ zero pad)
    hmin = jnp.minimum(h[:, MAX_COLS:], 0.0)     # eRUL / LURe branches (+ zero pad)

    # Branch sum: 128-lane tree reduction, then fold 128 -> 64 with an XLU roll.
    r = _tree_sum_128(hmax) + _tree_sum_128(hmin)                    # (TB, 128)
    r = r + pltpu.roll(r, shift=D, axis=1)
    o_ref[...] = r[:, :D].astype(o_ref.dtype)


def _choose_tb(batch):
    # Big tiles amortize the ~0.35us/grid-step overhead; capping at half the
    # batch guarantees >=2 grid steps for large B so both v7x TensorCores get
    # work.  Tiny batches collapse to a single tile.
    half = _round_up(max(1, (batch + 1) // 2), 8)
    return max(8, min(2048, half))


@jax.jit
def neural_network_forward(x, packed_w):
    """x: (B, 64) f32.  packed_w: (128, 896) bf16 from pack_weights()."""
    B, D = x.shape
    assert D == INPUT_LENGTH
    TB = _choose_tb(B)
    B_pad = _round_up(B, TB)
    # Zero padding is safe: every pre/post maps 0 -> 0; padded rows sliced off.
    x_p = x if B_pad == B else jnp.pad(x, ((0, B_pad - B), (0, 0)))

    out = pl.pallas_call(
        _network_kernel,
        out_shape=jax.ShapeDtypeStruct((B_pad, D), x.dtype),
        grid_spec=pltpu.PrefetchScalarGridSpec(
            num_scalar_prefetch=0,
            grid=(B_pad // TB,),
            in_specs=[
                pl.BlockSpec((TB, D), lambda i: (i, 0)),
                # Constant block index -> the single fused weight stays
                # VMEM-resident across grid steps (one DMA descriptor total).
                pl.BlockSpec((2 * D, PACK_COLS), lambda i: (0, 0)),
            ],
            out_specs=pl.BlockSpec((TB, D), lambda i: (i, 0)),
        ),
        compiler_params=pltpu.CompilerParams(
            # Batch tiles are independent -> shard across v7x's two TCs.
            dimension_semantics=("parallel",),
            # Headroom for the (TB, 896) f32 matmul result at TB=2048
            # (~21 MiB worst case); within physical VMEM on every generation.
            vmem_limit_bytes=64 * 1024 * 1024),
        cost_estimate=pl.CostEstimate(
            flops=2 * B_pad * (2 * D) * PACK_COLS,
            transcendentals=0,
            bytes_accessed=4 * 2 * B_pad * D + 2 * (2 * D) * PACK_COLS),
    )(x_p, packed_w)
    return out if B_pad == B else out[:B]


# ---- pure-JAX f32 reference matching the PyTorch module branch-by-branch ----
_ACT = {
    "LURe": lambda x: -jnp.maximum(x, 0.0),
    "LUUL": lambda x: -jnp.abs(x),
    "ReLU": lambda x: jnp.maximum(x, 0.0),
    "ULLU": lambda x: jnp.abs(x),
    "ULeR": lambda x: jnp.maximum(-x, 0.0),
    "eRUL": lambda x: -jnp.maximum(-x, 0.0),
}


def _reference_forward(x, weights):
    acc = jnp.zeros_like(x)
    for b, (pre, post) in enumerate(BRANCH_DEFS):
        acc = acc + _ACT[post](_ACT[pre](x) @ weights[b])
    return acc


if __name__ == "__main__":
    key = jax.random.PRNGKey(0)
    kx, kw = jax.random.split(key)

    B = 8
    x = jax.random.normal(kx, (B, INPUT_LENGTH), dtype=jnp.float32)

    # Deterministic init mimicking torch.nn.Linear's U(-1/sqrt(in), 1/sqrt(in)).
    bound = 1.0 / (INPUT_LENGTH ** 0.5)
    # torch weight is (out, in); transpose to (in, out) so pre(x) @ W.
    w_torch = jax.random.uniform(
        kw, (NUM_BRANCH, INPUT_LENGTH, INPUT_LENGTH),
        dtype=jnp.float32, minval=-bound, maxval=bound)
    weights = jnp.transpose(w_torch, (0, 2, 1))

    packed_w = pack_weights(weights)   # pack once, reuse across calls

    y = neural_network_forward(x, packed_w)
    y = jax.block_until_ready(y)

    y_ref = _reference_forward(x, weights)
    # bf16 matmul operands (f32 accumulation) -> slightly relaxed tolerance
    # versus the pure-f32 reference.
    assert jnp.allclose(y, y_ref, atol=5e-2, rtol=5e-2), "mismatch vs reference"

    print("KERNEL_OK")
</pallas_src>

<mosaic_0001>
module attributes {stable_mosaic.version = 11 : i64} {
  func.func @_network_kernel(%arg0: i32, %arg1: memref<8x64xf32, #tpu.memory_space<vmem>>, %arg2: memref<128x896xbf16, #tpu.memory_space<vmem>>, %arg3: memref<8x64xf32, #tpu.memory_space<vmem>>) attributes {dimension_semantics = [#tpu.dimension_semantics<parallel>], iteration_bounds = array<i64: 1>, scalar_prefetch = 0 : i64, scratch_operands = 0 : i64, tpu.core_type = #tpu.core_type<tc>, window_params = [{transform_indices = @transform_0, window_bounds = array<i64: 8, 64>}, {pipeline_mode = #tpu.pipeline_mode<synchronous>, transform_indices = @transform_1, window_bounds = array<i64: 128, 896>}, {transform_indices = @transform_2, window_bounds = array<i64: 8, 64>}]} {
    %c0 = arith.constant 0 : index
    %c0_0 = arith.constant 0 : index
    %0 = vector.load %arg1[%c0, %c0_0] : memref<8x64xf32, #tpu.memory_space<vmem>>, vector<8x64xf32>
    %1 = arith.truncf %0 : vector<8x64xf32> to vector<8x64xbf16>
    %cst = arith.constant 0.000000e+00 : bf16
    %2 = vector.broadcast %cst : bf16 to vector<8x64xbf16>
    %3 = arith.maximumf %1, %2 : vector<8x64xbf16>
    %cst_1 = arith.constant 0.000000e+00 : bf16
    %4 = vector.broadcast %cst_1 : bf16 to vector<8x64xbf16>
    %5 = arith.subf %4, %1 : vector<8x64xbf16>
    %cst_2 = arith.constant 0.000000e+00 : bf16
    %6 = vector.broadcast %cst_2 : bf16 to vector<8x64xbf16>
    %7 = arith.maximumf %5, %6 : vector<8x64xbf16>
    %8 = tpu.concatenate %3, %7 in 1 : vector<8x64xbf16>, vector<8x64xbf16> -> vector<8x128xbf16>
    %c0_3 = arith.constant 0 : index
    %c0_4 = arith.constant 0 : index
    %9 = vector.load %arg2[%c0_3, %c0_4] : memref<128x896xbf16, #tpu.memory_space<vmem>>, vector<128x896xbf16>
    %cst_5 = arith.constant dense<0.000000e+00> : vector<8x896xf32>
    %10 = tpu.matmul %8, %9, %cst_5 {dimension_numbers = #tpu.dot_dimension_numbers<[1], [0], [0], [1], [0, 0, 1, 1], [], []>} : vector<8x128xbf16>, vector<128x896xbf16>, vector<8x896xf32> -> vector<8x896xf32>
    %11 = vector.extract_strided_slice %10 {offsets = [0, 0], sizes = [8, 512], strides = [1, 1]} : vector<8x896xf32> to vector<8x512xf32>
    %cst_6 = arith.constant 0.000000e+00 : f32
    %12 = vector.broadcast %cst_6 : f32 to vector<8x512xf32>
    %13 = arith.maximumf %11, %12 : vector<8x512xf32>
    %14 = vector.extract_strided_slice %10 {offsets = [0, 512], sizes = [8, 384], strides = [1, 1]} : vector<8x896xf32> to vector<8x384xf32>
    %cst_7 = arith.constant 0.000000e+00 : f32
    %15 = vector.broadcast %cst_7 : f32 to vector<8x384xf32>
    %16 = arith.minimumf %14, %15 : vector<8x384xf32>
    %17 = vector.extract_strided_slice %13 {offsets = [0, 0], sizes = [8, 128], strides = [1, 1]} : vector<8x512xf32> to vector<8x128xf32>
    %18 = vector.extract_strided_slice %13 {offsets = [0, 128], sizes = [8, 128], strides = [1, 1]} : vector<8x512xf32> to vector<8x128xf32>
    %19 = vector.extract_strided_slice %13 {offsets = [0, 256], sizes = [8, 128], strides = [1, 1]} : vector<8x512xf32> to vector<8x128xf32>
    %20 = vector.extract_strided_slice %13 {offsets = [0, 384], sizes = [8, 128], strides = [1, 1]} : vector<8x512xf32> to vector<8x128xf32>
    %21 = arith.addf %17, %18 : vector<8x128xf32>
    %22 = arith.addf %19, %20 : vector<8x128xf32>
    %23 = arith.addf %21, %22 : vector<8x128xf32>
    %24 = vector.extract_strided_slice %16 {offsets = [0, 0], sizes = [8, 128], strides = [1, 1]} : vector<8x384xf32> to vector<8x128xf32>
    %25 = vector.extract_strided_slice %16 {offsets = [0, 128], sizes = [8, 128], strides = [1, 1]} : vector<8x384xf32> to vector<8x128xf32>
    %26 = vector.extract_strided_slice %16 {offsets = [0, 256], sizes = [8, 128], strides = [1, 1]} : vector<8x384xf32> to vector<8x128xf32>
    %27 = arith.addf %24, %25 : vector<8x128xf32>
    %28 = arith.addf %27, %26 : vector<8x128xf32>
    %29 = arith.addf %23, %28 : vector<8x128xf32>
    %c64_i32 = arith.constant 64 : i32
    %30 = tpu.dynamic_rotate %29 by %c64_i32 dim 1 : vector<8x128xf32>, i32 -> vector<8x128xf32>
    %31 = arith.addf %29, %30 : vector<8x128xf32>
    %32 = vector.extract_strided_slice %31 {offsets = [0, 0], sizes = [8, 64], strides = [1, 1]} : vector<8x128xf32> to vector<8x64xf32>
    %c0_8 = arith.constant 0 : index
    %c0_9 = arith.constant 0 : index
    %33 = vector.load %arg3[%c0_8, %c0_9] : memref<8x64xf32, #tpu.memory_space<vmem>>, vector<8x64xf32>
    tpu.vector_store %arg3[%c0_8, %c0_9], %32 {strides = array<i32>} : memref<8x64xf32, #tpu.memory_space<vmem>>, vector<8x64xf32>,
    return
  }
  func.func @transform_0(%arg0: i32) -> (i32, i32) {
    %c0_i32 = arith.constant 0 : i32
    %c0_i32_0 = arith.constant 0 : i32
    return %arg0, %c0_i32 : i32, i32
  }
  func.func @transform_1(%arg0: i32) -> (i32, i32) {
    %c0_i32 = arith.constant 0 : i32
    %c0_i32_0 = arith.constant 0 : i32
    %c0_i32_1 = arith.constant 0 : i32
    return %c0_i32, %c0_i32_0 : i32, i32
  }
  func.func @transform_2(%arg0: i32) -> (i32, i32) {
    %c0_i32 = arith.constant 0 : i32
    %c0_i32_0 = arith.constant 0 : i32
    return %arg0, %c0_i32 : i32, i32
  }
}

</mosaic_0001>

<llo_original>
// kernel: neural_network_forward.1
$region0: #{neural_network_forward.1}
  #allocation0 [shape = 'u32[]', space=smem, size = 0x4, offset = 0x4, fixed_abs, tag = 'smem constant byte address 0x4 - core index']
  #allocation1 [shape = 'u32[144,128]{1,0:T(1,128)}', space=vmem, size = 0x12000, scoped, tag = 'internal scratch']
  %s0 = inlined_call_operand.hbm [shape: f32[8,64], index: 0, kind: input, shape index: {}]
  %s1 = inlined_call_operand.hbm [shape: bf16[128,896], index: 1, kind: input, shape index: {}]
  %s2 = inlined_call_operand.hbm [shape: f32[8,64], index: 2, kind: output, shape index: {}]
  %s3 = sld [smem:[#allocation0]]
  $region26: #{neural_network_forward.1} parent=0
    _
  %s5 = ssub.s32 1, %s3
  %s6 = scalar_select 0, %s5, %s3
  $region1: #{neural_network_forward.1} parent=0
    #allocation2 [shape = 'u8[4096]{0}', space=vmem, size = 0x1000, scoped, tag = 'input window, operand 0, single buffered']
    #allocation3 [shape = 's32[1]{0}', space=sflag, size = 0x4, scoped, tag = 'scoped memory for neural_network_forward.1']
    #allocation4 [shape = 's32[1]{0}', space=sflag, size = 0x4, scoped, tag = 'scoped memory for neural_network_forward.1']
    #allocation5 [shape = 'u8[229376]{0}', space=vmem, size = 0x38000, scoped, tag = 'input window, operand 1, single buffered']
    #allocation6 [shape = 's32[1]{0}', space=sflag, size = 0x4, scoped, tag = 'scoped memory for neural_network_forward.1']
    #allocation7 [shape = 'u8[4096]{0}', space=vmem, size = 0x1000, scoped, tag = 'output window, operand 0, single buffered']
    %7 = vsyncpa [#allocation3], 0
    %8 = vsyncpa [#allocation6], 0
    %9 = vsyncpa [#allocation4], 0
    // Predicated region
    $region2: #{neural_network_forward.1} parent=1 // pred_check
      _
    $region3: #{neural_network_forward.1} parent=1 // pred_check_branch
      %11 = sbr.rel (0) target = $region5
    $region4: #{neural_network_forward.1} parent=1 // pred_region
      %s13 = ssub.s32 128, 128
      %14 = vsyncadd [#allocation3], %s13
      %s16 = sshll.u32 [#allocation2], 4
      %s17 = int_to_ptr.vmem [resolvable:$true] %s16
      %19 = dma.hbm_to_vmem [thread:$0]  %s0, 128, %s17, [#allocation3]
    $region5: #{neural_network_forward.1} parent=1 // pred_fallthru
      _
    // Predicated region
    $region6: #{neural_network_forward.1} parent=1 // pred_check
      _
    $region7: #{neural_network_forward.1} parent=1 // pred_check_branch
      %21 = sbr.rel (0) target = $region9
    $region8: #{neural_network_forward.1} parent=1 // pred_region
      %s23 = ssub.s32 7168, 7168
      %24 = vsyncadd [#allocation6], %s23
      %s25 = sshll.u32 [#allocation5], 4
      %s26 = int_to_ptr.vmem [resolvable:$true] %s25
      %31 = dma.hbm_to_vmem [thread:$0]  %s1, 7168, %s26, [#allocation6], 448, 448, 28
    $region9: #{neural_network_forward.1} parent=1 // pred_fallthru
      _
    // Predicated region
    $region10: #{neural_network_forward.1} parent=1 // pred_check
      _
    $region11: #{neural_network_forward.1} parent=1 // pred_check_branch
      %33 = sbr.rel (0) target = $region13
    $region12: #{neural_network_forward.1} parent=1 // pred_region
      %34 = dma.done [#allocation3], 128
    $region13: #{neural_network_forward.1} parent=1 // pred_fallthru
      _
    // Predicated region
    $region14: #{neural_network_forward.1} parent=1 // pred_check
      _
    $region15: #{neural_network_forward.1} parent=1 // pred_check_branch
      %36 = sbr.rel (0) target = $region17
    $region16: #{neural_network_forward.1} parent=1 // pred_region
      %37 = dma.done [#allocation6], 7168
    $region17: #{neural_network_forward.1} parent=1 // pred_fallthru
      _
    %v39 = vld [vmem:[#allocation2] sm:$0xff]
    %v40 = vpack.c.bf16 %v39, %v39
    %v41 = vmax.bf16 %v40, 0
    %v42 = vsub.bf16 0, %v40
    %v43 = vmax.bf16 %v42, 0
    %45 = vrot.lane.b32.xlu0 %v43, 64
    %v46 = vpop.permute.xlu0 %45
    %vm47 = vcmask 523264
    %v50 = vsel %vm47, %v41, %v46
    %v52 = vld [vmem:[#allocation5] sm:$0xff]
    %v53 = vld [vmem:[#allocation5 + $0x8] sm:$0xff]
    %v54 = vld [vmem:[#allocation5 + $0x10] sm:$0xff]
    %v55 = vld [vmem:[#allocation5 + $0x18] sm:$0xf]
    %v56 = vld [vmem:[#allocation5 + $0x1c] sm:$0xff]
    %v57 = vld [vmem:[#allocation5 + $0x24] sm:$0xff]
    %v58 = vld [vmem:[#allocation5 + $0x2c] sm:$0xff]
    %v59 = vld [vmem:[#allocation5 + $0x34] sm:$0xf]
    %v60 = vld [vmem:[#allocation5 + $0x38] sm:$0xff]
    %v61 = vld [vmem:[#allocation5 + $0x40] sm:$0xff]
    %v62 = vld [vmem:[#allocation5 + $0x48] sm:$0xff]
    %v63 = vld [vmem:[#allocation5 + $0x50] sm:$0xf]
    %v64 = vld [vmem:[#allocation5 + $0x54] sm:$0xff]
    %v65 = vld [vmem:[#allocation5 + $0x5c] sm:$0xff]
    %v66 = vld [vmem:[#allocation5 + $0x64] sm:$0xff]
    %v67 = vld [vmem:[#allocation5 + $0x6c] sm:$0xf]
    %v68 = vld [vmem:[#allocation5 + $0x70] sm:$0xff]
    %v69 = vld [vmem:[#allocation5 + $0x78] sm:$0xff]
    %v70 = vld [vmem:[#allocation5 + $0x80] sm:$0xff]
    %v71 = vld [vmem:[#allocation5 + $0x88] sm:$0xf]
    %v72 = vld [vmem:[#allocation5 + $0x8c] sm:$0xff]
    %v73 = vld [vmem:[#allocation5 + $0x94] sm:$0xff]
    %v74 = vld [vmem:[#allocation5 + $0x9c] sm:$0xff]
    %v75 = vld [vmem:[#allocation5 + $0xa4] sm:$0xf]
    %v76 = vld [vmem:[#allocation5 + $0xa8] sm:$0xff]
    %v77 = vld [vmem:[#allocation5 + $0xb0] sm:$0xff]
    %v78 = vld [vmem:[#allocation5 + $0xb8] sm:$0xff]
    %v79 = vld [vmem:[#allocation5 + $0xc0] sm:$0xf]
    %v80 = vld [vmem:[#allocation5 + $0xc4] sm:$0xff]
    %v81 = vld [vmem:[#allocation5 + $0xcc] sm:$0xff]
    %v82 = vld [vmem:[#allocation5 + $0xd4] sm:$0xff]
    %v83 = vld [vmem:[#allocation5 + $0xdc] sm:$0xf]
    %v84 = vld [vmem:[#allocation5 + $0xe0] sm:$0xff]
    %v85 = vld [vmem:[#allocation5 + $0xe8] sm:$0xff]
    %v86 = vld [vmem:[#allocation5 + $0xf0] sm:$0xff]
    %v87 = vld [vmem:[#allocation5 + $0xf8] sm:$0xf]
    %v88 = vld [vmem:[#allocation5 + $0xfc] sm:$0xff]
    %v89 = vld [vmem:[#allocation5 + $0x104] sm:$0xff]
    %v90 = vld [vmem:[#allocation5 + $0x10c] sm:$0xff]
    %v91 = vld [vmem:[#allocation5 + $0x114] sm:$0xf]
    %v92 = vld [vmem:[#allocation5 + $0x118] sm:$0xff]
    %v93 = vld [vmem:[#allocation5 + $0x120] sm:$0xff]
    %v94 = vld [vmem:[#allocation5 + $0x128] sm:$0xff]
    %v95 = vld [vmem:[#allocation5 + $0x130] sm:$0xf]
    %v96 = vld [vmem:[#allocation5 + $0x134] sm:$0xff]
    %v97 = vld [vmem:[#allocation5 + $0x13c] sm:$0xff]
    %v98 = vld [vmem:[#allocation5 + $0x144] sm:$0xff]
    %v99 = vld [vmem:[#allocation5 + $0x14c] sm:$0xf]
    %v100 = vld [vmem:[#allocation5 + $0x150] sm:$0xff]
    %v101 = vld [vmem:[#allocation5 + $0x158] sm:$0xff]
    %v102 = vld [vmem:[#allocation5 + $0x160] sm:$0xff]
    %v103 = vld [vmem:[#allocation5 + $0x168] sm:$0xf]
    %v104 = vld [vmem:[#allocation5 + $0x16c] sm:$0xff]
    %v105 = vld [vmem:[#allocation5 + $0x174] sm:$0xff]
    %v106 = vld [vmem:[#allocation5 + $0x17c] sm:$0xff]
    %v107 = vld [vmem:[#allocation5 + $0x184] sm:$0xf]
    %v108 = vld [vmem:[#allocation5 + $0x188] sm:$0xff]
    %v109 = vld [vmem:[#allocation5 + $0x190] sm:$0xff]
    %v110 = vld [vmem:[#allocation5 + $0x198] sm:$0xff]
    %v111 = vld [vmem:[#allocation5 + $0x1a0] sm:$0xf]
    %v112 = vld [vmem:[#allocation5 + $0x1a4] sm:$0xff]
    %v113 = vld [vmem:[#allocation5 + $0x1ac] sm:$0xff]
    %v114 = vld [vmem:[#allocation5 + $0x1b4] sm:$0xff]
    %v115 = vld [vmem:[#allocation5 + $0x1bc] sm:$0xf]
    %v180 = vunpack.c.l.b16 %v52
    %v181 = vunpack.c.h.b16 %v52
    %v182 = vunpack.c.l.b16 %v53
    %v183 = vunpack.c.h.b16 %v53
    %v184 = vunpack.c.l.b16 %v54
    %v185 = vunpack.c.h.b16 %v54
    %v186 = vunpack.c.l.b16 %v55
    %v187 = vunpack.c.l.b16 %v56
    %v188 = vunpack.c.h.b16 %v56
    %v189 = vunpack.c.l.b16 %v57
    %v190 = vunpack.c.h.b16 %v57
    %v191 = vunpack.c.l.b16 %v58
    %v192 = vunpack.c.h.b16 %v58
    %v193 = vunpack.c.l.b16 %v59
    %v194 = vunpack.c.l.b16 %v60
    %v195 = vunpack.c.h.b16 %v60
    %v196 = vunpack.c.l.b16 %v61
    %v197 = vunpack.c.h.b16 %v61
    %v198 = vunpack.c.l.b16 %v62
    %v199 = vunpack.c.h.b16 %v62
    %v200 = vunpack.c.l.b16 %v63
    %v201 = vunpack.c.l.b16 %v64
    %v202 = vunpack.c.h.b16 %v64
    %v203 = vunpack.c.l.b16 %v65
    %v204 = vunpack.c.h.b16 %v65
    %v205 = vunpack.c.l.b16 %v66
    %v206 = vunpack.c.h.b16 %v66
    %v207 = vunpack.c.l.b16 %v67
    %v208 = vunpack.c.l.b16 %v68
    %v209 = vunpack.c.h.b16 %v68
    %v210 = vunpack.c.l.b16 %v69
    %v211 = vunpack.c.h.b16 %v69
    %v212 = vunpack.c.l.b16 %v70
    %v213 = vunpack.c.h.b16 %v70
    %v214 = vunpack.c.l.b16 %v71
    %v215 = vunpack.c.l.b16 %v72
    %v216 = vunpack.c.h.b16 %v72
    %v217 = vunpack.c.l.b16 %v73
    %v218 = vunpack.c.h.b16 %v73
    %v219 = vunpack.c.l.b16 %v74
    %v220 = vunpack.c.h.b16 %v74
    %v221 = vunpack.c.l.b16 %v75
    %v222 = vunpack.c.l.b16 %v76
    %v223 = vunpack.c.h.b16 %v76
    %v224 = vunpack.c.l.b16 %v77
    %v225 = vunpack.c.h.b16 %v77
    %v226 = vunpack.c.l.b16 %v78
    %v227 = vunpack.c.h.b16 %v78
    %v228 = vunpack.c.l.b16 %v79
    %v229 = vunpack.c.l.b16 %v80
    %v230 = vunpack.c.h.b16 %v80
    %v231 = vunpack.c.l.b16 %v81
    %v232 = vunpack.c.h.b16 %v81
    %v233 = vunpack.c.l.b16 %v82
    %v234 = vunpack.c.h.b16 %v82
    %v235 = vunpack.c.l.b16 %v83
    %v236 = vunpack.c.l.b16 %v84
    %v237 = vunpack.c.h.b16 %v84
    %v238 = vunpack.c.l.b16 %v85
    %v239 = vunpack.c.h.b16 %v85
    %v240 = vunpack.c.l.b16 %v86
    %v241 = vunpack.c.h.b16 %v86
    %v242 = vunpack.c.l.b16 %v87
    %v243 = vunpack.c.l.b16 %v88
    %v244 = vunpack.c.h.b16 %v88
    %v245 = vunpack.c.l.b16 %v89
    %v246 = vunpack.c.h.b16 %v89
    %v247 = vunpack.c.l.b16 %v90
    %v248 = vunpack.c.h.b16 %v90
    %v249 = vunpack.c.l.b16 %v91
    %v250 = vunpack.c.l.b16 %v92
    %v251 = vunpack.c.h.b16 %v92
    %v252 = vunpack.c.l.b16 %v93
    %v253 = vunpack.c.h.b16 %v93
    %v254 = vunpack.c.l.b16 %v94
    %v255 = vunpack.c.h.b16 %v94
    %v256 = vunpack.c.l.b16 %v95
    %v257 = vunpack.c.l.b16 %v96
    %v258 = vunpack.c.h.b16 %v96
    %v259 = vunpack.c.l.b16 %v97
    %v260 = vunpack.c.h.b16 %v97
    %v261 = vunpack.c.l.b16 %v98
    %v262 = vunpack.c.h.b16 %v98
    %v263 = vunpack.c.l.b16 %v99
    %v264 = vunpack.c.l.b16 %v100
    %v265 = vunpack.c.h.b16 %v100
    %v266 = vunpack.c.l.b16 %v101
    %v267 = vunpack.c.h.b16 %v101
    %v268 = vunpack.c.l.b16 %v102
    %v269 = vunpack.c.h.b16 %v102
    %v270 = vunpack.c.l.b16 %v103
    %v271 = vunpack.c.l.b16 %v104
    %v272 = vunpack.c.h.b16 %v104
    %v273 = vunpack.c.l.b16 %v105
    %v274 = vunpack.c.h.b16 %v105
    %v275 = vunpack.c.l.b16 %v106
    %v276 = vunpack.c.h.b16 %v106
    %v277 = vunpack.c.l.b16 %v107
    %v278 = vunpack.c.l.b16 %v108
    %v279 = vunpack.c.h.b16 %v108
    %v280 = vunpack.c.l.b16 %v109
    %v281 = vunpack.c.h.b16 %v109
    %v282 = vunpack.c.l.b16 %v110
    %v283 = vunpack.c.h.b16 %v110
    %v284 = vunpack.c.l.b16 %v111
    %v285 = vunpack.c.l.b16 %v112
    %v286 = vunpack.c.h.b16 %v112
    %v287 = vunpack.c.l.b16 %v113
    %v288 = vunpack.c.h.b16 %v113
    %v289 = vunpack.c.l.b16 %v114
    %v290 = vunpack.c.h.b16 %v114
    %v291 = vunpack.c.l.b16 %v115
    %v292 = vpack.c.b16 %v187, %v180
    %v293 = vpack.c.b16 %v188, %v181
    %v294 = vpack.c.b16 %v189, %v182
    %v295 = vpack.c.b16 %v190, %v183
    %v296 = vpack.c.b16 %v191, %v184
    %v297 = vpack.c.b16 %v192, %v185
    %v298 = vpack.c.b16 %v193, %v186
    %v299 = vpack.c.b16 %v201, %v194
    %v300 = vpack.c.b16 %v202, %v195
    %v301 = vpack.c.b16 %v203, %v196
    %v302 = vpack.c.b16 %v204, %v197
    %v303 = vpack.c.b16 %v205, %v198
    %v304 = vpack.c.b16 %v206, %v199
    %v305 = vpack.c.b16 %v207, %v200
    %v306 = vpack.c.b16 %v215, %v208
    %v307 = vpack.c.b16 %v216, %v209
    %v308 = vpack.c.b16 %v217, %v210
    %v309 = vpack.c.b16 %v218, %v211
    %v310 = vpack.c.b16 %v219, %v212
    %v311 = vpack.c.b16 %v220, %v213
    %v312 = vpack.c.b16 %v221, %v214
    %v313 = vpack.c.b16 %v229, %v222
    %v314 = vpack.c.b16 %v230, %v223
    %v315 = vpack.c.b16 %v231, %v224
    %v316 = vpack.c.b16 %v232, %v225
    %v317 = vpack.c.b16 %v233, %v226
    %v318 = vpack.c.b16 %v234, %v227
    %v319 = vpack.c.b16 %v235, %v228
    %v320 = vpack.c.b16 %v243, %v236
    %v321 = vpack.c.b16 %v244, %v237
    %v322 = vpack.c.b16 %v245, %v238
    %v323 = vpack.c.b16 %v246, %v239
    %v324 = vpack.c.b16 %v247, %v240
    %v325 = vpack.c.b16 %v248, %v241
    %v326 = vpack.c.b16 %v249, %v242
    %v327 = vpack.c.b16 %v257, %v250
    %v328 = vpack.c.b16 %v258, %v251
    %v329 = vpack.c.b16 %v259, %v252
    %v330 = vpack.c.b16 %v260, %v253
    %v331 = vpack.c.b16 %v261, %v254
    %v332 = vpack.c.b16 %v262, %v255
    %v333 = vpack.c.b16 %v263, %v256
    %v334 = vpack.c.b16 %v271, %v264
    %v335 = vpack.c.b16 %v272, %v265
    %v336 = vpack.c.b16 %v273, %v266
    %v337 = vpack.c.b16 %v274, %v267
    %v338 = vpack.c.b16 %v275, %v268
    %v339 = vpack.c.b16 %v276, %v269
    %v340 = vpack.c.b16 %v277, %v270
    %v341 = vpack.c.b16 %v285, %v278
    %v342 = vpack.c.b16 %v286, %v279
    %v343 = vpack.c.b16 %v287, %v280
    %v344 = vpack.c.b16 %v288, %v281
    %v345 = vpack.c.b16 %v289, %v282
    %v346 = vpack.c.b16 %v290, %v283
    %v347 = vpack.c.b16 %v291, %v284
    %404 = vmatprep.subr.bf16.mxu0 %v293
    %405 = vmatpush1.bf16.msra.mxu0 %v292
    %406 = vmatprep.subr.bf16.mxu0 %v300
    %407 = vmatpush1.bf16.msra.mxu0 %v299
    %408 = vmatprep.subr.bf16.mxu0 %v307
    %409 = vmatpush1.bf16.msra.mxu0 %v306
    %410 = vmatprep.subr.bf16.mxu0 %v314
    %411 = vmatpush1.bf16.msra.mxu0 %v313
    %412 = vmatprep.subr.bf16.mxu0 %v321
    %413 = vmatpush1.bf16.msra.mxu0 %v320
    %414 = vmatprep.subr.bf16.mxu0 %v328
    %415 = vmatpush1.bf16.msra.mxu0 %v327
    %416 = vmatprep.subr.bf16.mxu0 %v335
    %417 = vmatpush1.bf16.msra.mxu0 %v334
    %418 = vmatprep.subr.bf16.mxu0 %v342
    %419 = vmatpush1.bf16.msra.mxu0 %v341
    %420 = vmatprep.subr.bf16.mxu0 0
    %421 = vmatpush1.bf16.msra.mxu0 0
    %422 = vmatprep.subr.bf16.mxu0 0
    %423 = vmatpush1.bf16.msra.mxu0 0
    %424 = vmatprep.subr.bf16.mxu0 0
    %425 = vmatpush1.bf16.msra.mxu0 0
    %426 = vmatprep.subr.bf16.mxu0 0
    %427 = vmatpush1.bf16.msra.mxu0 0
    %428 = vmatprep.subr.bf16.mxu0 0
    %429 = vmatpush1.bf16.msra.mxu0 0
    %430 = vmatprep.subr.bf16.mxu0 0
    %431 = vmatpush1.bf16.msra.mxu0 0
    %432 = vmatprep.subr.bf16.mxu0 0
    %433 = vmatpush1.bf16.msra.mxu0 0
    %434 = vmatprep.subr.bf16.mxu0 0
    %435 = vmatpush1.bf16.msra.mxu0 0
    %436 = vmatprep.mubr.bf16.mxu0 0
    %437 = vmatmul.mubr.bf16.gmra.mrb[0].mxu0 %v50
    %v438 = vpop.f32.mrb[0].mxu0
    %v439 = vadd.f32 0.0, %v438
    %v440 = vpop.f32.mrb[0].mxu0
    %v441 = vadd.f32 0.0, %v440
    %v442 = vpop.f32.mrb[0].mxu0
    %v443 = vpop.f32.mrb[0].mxu0
    %444 = vdwg.mxu0
    %445 = vmatprep.subr.bf16.mxu0 %v295
    %446 = vmatpush1.bf16.msra.mxu0 %v294
    %447 = vmatprep.subr.bf16.mxu0 %v302
    %448 = vmatpush1.bf16.msra.mxu0 %v301
    %449 = vmatprep.subr.bf16.mxu0 %v309
    %450 = vmatpush1.bf16.msra.mxu0 %v308
    %451 = vmatprep.subr.bf16.mxu0 %v316
    %452 = vmatpush1.bf16.msra.mxu0 %v315
    %453 = vmatprep.subr.bf16.mxu0 %v323
    %454 = vmatpush1.bf16.msra.mxu0 %v322
    %455 = vmatprep.subr.bf16.mxu0 %v330
    %456 = vmatpush1.bf16.msra.mxu0 %v329
    %457 = vmatprep.subr.bf16.mxu0 %v337
    %458 = vmatpush1.bf16.msra.mxu0 %v336
    %459 = vmatprep.subr.bf16.mxu0 %v344
    %460 = vmatpush1.bf16.msra.mxu0 %v343
    %461 = vmatprep.subr.bf16.mxu0 0
    %462 = vmatpush1.bf16.msra.mxu0 0
    %463 = vmatprep.subr.bf16.mxu0 0
    %464 = vmatpush1.bf16.msra.mxu0 0
    %465 = vmatprep.subr.bf16.mxu0 0
    %466 = vmatpush1.bf16.msra.mxu0 0
    %467 = vmatprep.subr.bf16.mxu0 0
    %468 = vmatpush1.bf16.msra.mxu0 0
    %469 = vmatprep.subr.bf16.mxu0 0
    %470 = vmatpush1.bf16.msra.mxu0 0
    %471 = vmatprep.subr.bf16.mxu0 0
    %472 = vmatpush1.bf16.msra.mxu0 0
    %473 = vmatprep.subr.bf16.mxu0 0
    %474 = vmatpush1.bf16.msra.mxu0 0
    %475 = vmatprep.subr.bf16.mxu0 0
    %476 = vmatpush1.bf16.msra.mxu0 0
    %477 = vmatprep.mubr.bf16.mxu0 0
    %478 = vmatmul.mubr.bf16.gmra.mrb[0].mxu0 %v50
    %v479 = vpop.f32.mrb[0].mxu0
    %v480 = vadd.f32 0.0, %v479
    %v481 = vpop.f32.mrb[0].mxu0
    %v482 = vadd.f32 0.0, %v481
    %v483 = vpop.f32.mrb[0].mxu0
    %v484 = vpop.f32.mrb[0].mxu0
    %485 = vdwg.mxu0
    %486 = vmatprep.subr.bf16.mxu0 %v297
    %487 = vmatpush1.bf16.msra.mxu0 %v296
    %488 = vmatprep.subr.bf16.mxu0 %v304
    %489 = vmatpush1.bf16.msra.mxu0 %v303
    %490 = vmatprep.subr.bf16.mxu0 %v311
    %491 = vmatpush1.bf16.msra.mxu0 %v310
    %492 = vmatprep.subr.bf16.mxu0 %v318
    %493 = vmatpush1.bf16.msra.mxu0 %v317
    %494 = vmatprep.subr.bf16.mxu0 %v325
    %495 = vmatpush1.bf16.msra.mxu0 %v324
    %496 = vmatprep.subr.bf16.mxu0 %v332
    %497 = vmatpush1.bf16.msra.mxu0 %v331
    %498 = vmatprep.subr.bf16.mxu0 %v339
    %499 = vmatpush1.bf16.msra.mxu0 %v338
    %500 = vmatprep.subr.bf16.mxu0 %v346
    %501 = vmatpush1.bf16.msra.mxu0 %v345
    %502 = vmatprep.subr.bf16.mxu0 0
    %503 = vmatpush1.bf16.msra.mxu0 0
    %504 = vmatprep.subr.bf16.mxu0 0
    %505 = vmatpush1.bf16.msra.mxu0 0
    %506 = vmatprep.subr.bf16.mxu0 0
    %507 = vmatpush1.bf16.msra.mxu0 0
    %508 = vmatprep.subr.bf16.mxu0 0
    %509 = vmatpush1.bf16.msra.mxu0 0
    %510 = vmatprep.subr.bf16.mxu0 0
    %511 = vmatpush1.bf16.msra.mxu0 0
    %512 = vmatprep.subr.bf16.mxu0 0
    %513 = vmatpush1.bf16.msra.mxu0 0
    %514 = vmatprep.subr.bf16.mxu0 0
    %515 = vmatpush1.bf16.msra.mxu0 0
    %516 = vmatprep.subr.bf16.mxu0 0
    %517 = vmatpush1.bf16.msra.mxu0 0
    %518 = vmatprep.mubr.bf16.mxu0 0
    %519 = vmatmul.mubr.bf16.gmra.mrb[0].mxu0 %v50
    %v520 = vpop.f32.mrb[0].mxu0
    %v521 = vadd.f32 0.0, %v520
    %v522 = vpop.f32.mrb[0].mxu0
    %v523 = vadd.f32 0.0, %v522
    %v524 = vpop.f32.mrb[0].mxu0
    %v525 = vpop.f32.mrb[0].mxu0
    %526 = vdwg.mxu0
    %527 = vmatprep.subr.bf16.mxu0 0
    %528 = vmatpush1.bf16.msra.mxu0 %v298
    %529 = vmatprep.subr.bf16.mxu0 0
    %530 = vmatpush1.bf16.msra.mxu0 %v305
    %531 = vmatprep.subr.bf16.mxu0 0
    %532 = vmatpush1.bf16.msra.mxu0 %v312
    %533 = vmatprep.subr.bf16.mxu0 0
    %534 = vmatpush1.bf16.msra.mxu0 %v319
    %535 = vmatprep.subr.bf16.mxu0 0
    %536 = vmatpush1.bf16.msra.mxu0 %v326
    %537 = vmatprep.subr.bf16.mxu0 0
    %538 = vmatpush1.bf16.msra.mxu0 %v333
    %539 = vmatprep.subr.bf16.mxu0 0
    %540 = vmatpush1.bf16.msra.mxu0 %v340
    %541 = vmatprep.subr.bf16.mxu0 0
    %542 = vmatpush1.bf16.msra.mxu0 %v347
    %543 = vmatprep.subr.bf16.mxu0 0
    %544 = vmatpush1.bf16.msra.mxu0 0
    %545 = vmatprep.subr.bf16.mxu0 0
    %546 = vmatpush1.bf16.msra.mxu0 0
    %547 = vmatprep.subr.bf16.mxu0 0
    %548 = vmatpush1.bf16.msra.mxu0 0
    %549 = vmatprep.subr.bf16.mxu0 0
    %550 = vmatpush1.bf16.msra.mxu0 0
    %551 = vmatprep.subr.bf16.mxu0 0
    %552 = vmatpush1.bf16.msra.mxu0 0
    %553 = vmatprep.subr.bf16.mxu0 0
    %554 = vmatpush1.bf16.msra.mxu0 0
    %555 = vmatprep.subr.bf16.mxu0 0
    %556 = vmatpush1.bf16.msra.mxu0 0
    %557 = vmatprep.subr.bf16.mxu0 0
    %558 = vmatpush1.bf16.msra.mxu0 0
    %559 = vmatprep.mubr.bf16.mxu0 0
    %560 = vmatmul.mubr.bf16.gmra.mrb[0].mxu0 %v50
    %v561 = vpop.f32.mrb[0].mxu0
    %v562 = vadd.f32 0.0, %v561
    %v563 = vpop.f32.mrb[0].mxu0
    %v564 = vpop.f32.mrb[0].mxu0
    %v565 = vpop.f32.mrb[0].mxu0
    %566 = vdwg.mxu0
    %v567 = vmax.f32 %v439, 0.0
    %v568 = vmax.f32 %v441, 0.0
    %v569 = vmax.f32 %v480, 0.0
    %v570 = vmax.f32 %v482, 0.0
    %v571 = vmin.f32 %v521, 0.0
    %v572 = vmin.f32 %v523, 0.0
    %v573 = vmin.f32 %v562, 0.0
    %v574 = vadd.f32 %v567, %v568
    %v575 = vadd.f32 %v569, %v570
    %v576 = vadd.f32 %v574, %v575
    %v577 = vadd.f32 %v571, %v572
    %v578 = vadd.f32 %v577, %v573
    %v579 = vadd.f32 %v576, %v578
    %580 = vrot.lane.b32.xlu0 %v579, 64
    %v581 = vpop.permute.xlu0 %580
    %v582 = vadd.f32 %v579, %v581
    %583 = vst.msk [vmem:[#allocation7] sm:$0xff] %vm47, %v582
    // Predicated region
    $region18: #{neural_network_forward.1} parent=1 // pred_check
      _
    $region19: #{neural_network_forward.1} parent=1 // pred_check_branch
      %585 = sbr.rel (0) target = $region21
    $region20: #{neural_network_forward.1} parent=1 // pred_region
      %s587 = ssub.s32 128, 128
      %588 = vsyncadd [#allocation4], %s587
      %s590 = sshll.u32 [#allocation7], 4
      %s591 = int_to_ptr.vmem [resolvable:$true] %s590
      %593 = dma.vmem_to_hbm [thread:$0]  %s591, 128, %s2, [#allocation4]
    $region21: #{neural_network_forward.1} parent=1 // pred_fallthru
      _
    // Predicated region
    $region22: #{neural_network_forward.1} parent=1 // pred_check
      _
    $region23: #{neural_network_forward.1} parent=1 // pred_check_branch
      %595 = sbr.rel (0) target = $region25
    $region24: #{neural_network_forward.1} parent=1 // pred_region
      %596 = dma.done [#allocation4], 128
    $region25: #{neural_network_forward.1} parent=1 // pred_fallthru
      _
    %597 = vsyncpa [#allocation3], 1
    %598 = vsyncpa [#allocation6], 1
    %599 = vsyncpa [#allocation4], 1

</llo_original>
